<compile_context>
chip_gen: v7x
topology: tpu7x:2x2x1
jax: 0.10.0
libtpu: 0.0.40
codegen_flags: <defaults>
</compile_context>

<pallas_src>
import functools

import jax
import jax.numpy as jnp
from jax import lax
from jax.experimental import pallas as pl
from jax.experimental.pallas import tpu as pltpu


def _content_loss_kernel(tile_rows, steps, ragged_rows, use_sublane_acc,
                         x_ref, t_ref, out_ref, acc_ref):
    c = pl.program_id(0)            # slice axis ("parallel"; v7x TensorCores)
    j = pl.program_id(1)            # streaming / reduction axis ("arbitrary")
    last_j = steps - 1

    @pl.when(j == 0)
    def _():
        acc_ref[...] = jnp.zeros_like(acc_ref)

    x = x_ref[...].astype(jnp.float32)
    t = t_ref[...].astype(jnp.float32)
    d = x - t
    sq = d * d

    def _fold(v):
        # (tile_rows, w) -> (8, w) using only vreg+vreg adds (no XLU) when the
        # tile is 8-row aligned; tiny single-block case collapses to (1, w).
        if use_sublane_acc:
            return jnp.sum(v.reshape(tile_rows // 8, 8, v.shape[-1]), axis=0)
        return jnp.sum(v, axis=0, keepdims=True)

    def _accum(part):
        if use_sublane_acc:
            acc_ref[...] += part
        else:
            acc_ref[0:1, :] = acc_ref[0:1, :] + part

    if ragged_rows:
        # Only the very last block of the last slice is ragged; gate the mask
        # behind a runtime pl.when so steady-state steps never pay for it.
        is_ragged_block = jnp.logical_and(c == pl.num_programs(0) - 1,
                                          j == last_j)

        @pl.when(jnp.logical_not(is_ragged_block))
        def _():
            _accum(_fold(sq))

        @pl.when(is_ragged_block)
        def _():
            ridx = lax.broadcasted_iota(jnp.int32, (tile_rows, 1), 0)
            _accum(_fold(jnp.where(ridx < ragged_rows, sq, 0.0)))
    else:
        _accum(_fold(sq))

    @pl.when(j == last_j)
    def _():
        # One cross-sublane collapse + one lane-dense (1, w) store per slice.
        out_ref[...] = jnp.sum(acc_ref[...], axis=0, keepdims=True)[None]


def content_loss_forward(inputs, target, *, block_rows=4096, lane_width=512,
                         num_slices=2):
    """ContentLoss.forward: returns (inputs, mse_loss_scalar)."""
    assert inputs.shape == target.shape, "inputs and target must match"
    n = inputs.size
    w = lane_width

    x = inputs.reshape(-1)
    t = target.reshape(-1)

    rows = n // w
    main = rows * w
    tail = n - main

    main_sum = jnp.float32(0.0)
    if rows > 0:
        x2 = (x if tail == 0 else x[:main]).reshape(rows, w)
        t2 = (t if tail == 0 else t[:main]).reshape(rows, w)

        # Keep tiles 8-row aligned so the per-step fold stays VPU-only.
        block_rows = max(8, (block_rows // 8) * 8)
        tile_rows = block_rows if rows >= block_rows else rows
        total_blocks = pl.cdiv(rows, tile_rows)

        # Use the slice ("parallel") axis only when it divides the block count
        # exactly: no index clamp, no duplicate DMA, balanced TensorCores.
        slices = 1
        for s in range(min(num_slices, total_blocks), 0, -1):
            if total_blocks % s == 0:
                slices = s
                break
        steps = total_blocks // slices

        ragged_rows = rows % tile_rows          # valid rows in the last block
        use_sublane_acc = (tile_rows % 8 == 0)

        kernel = functools.partial(_content_loss_kernel, tile_rows, steps,
                                   ragged_rows, use_sublane_acc)

        def in_map(c, j):
            return (c * steps + j, 0)

        partials = pl.pallas_call(
            kernel,
            out_shape=jax.ShapeDtypeStruct((slices, 1, w), jnp.float32),
            grid_spec=pltpu.PrefetchScalarGridSpec(
                num_scalar_prefetch=0,
                grid=(slices, steps),
                in_specs=[
                    pl.BlockSpec((tile_rows, w), in_map),
                    pl.BlockSpec((tile_rows, w), in_map),
                ],
                out_specs=pl.BlockSpec((1, 1, w), lambda c, j: (c, 0, 0)),
                scratch_shapes=[pltpu.VMEM((8, w), jnp.float32)],
            ),
            compiler_params=pltpu.CompilerParams(
                dimension_semantics=("parallel", "arbitrary"),
                vmem_limit_bytes=40 * 1024 * 1024,
            ),
        )(x2, t2)
        main_sum = jnp.sum(partials)
    # else: n < 512 — whole reduction handled by the tail path below.

    tail_sum = jnp.float32(0.0)
    if tail:
        # <512-element remainder folded in by the wrapper (no full-array pad).
        dt = x[main:].astype(jnp.float32) - t[main:].astype(jnp.float32)
        tail_sum = jnp.sum(dt * dt)

    loss = (main_sum + tail_sum) / jnp.float32(n)
    # forward() is an identity on the activations — return them untouched.
    return inputs, loss


if __name__ == "__main__":
    key = jax.random.PRNGKey(0)
    k_in, k_tgt = jax.random.split(key)

    # Case 1: small NCHW conv-feature shape, single-block path.
    x = jax.random.normal(k_in, (2, 4, 16, 16), dtype=jnp.float32)
    target = jax.random.normal(k_tgt, (2, 4, 16, 16), dtype=jnp.float32)
    out, loss = content_loss_forward(x, target)
    out, loss = jax.block_until_ready((out, loss))
    ref_loss = jnp.mean((x - target) ** 2)
    assert jnp.allclose(out, x), "passthrough mismatch"
    assert jnp.allclose(loss, ref_loss, rtol=1e-5, atol=1e-6), (loss, ref_loss)

    # Case 2: odd block count -> slice axis collapses to 1; exercises the
    # multi-step accumulator, the gated ragged-row mask and the wrapper tail.
    k2a, k2b = jax.random.split(k_tgt)
    x2 = jax.random.normal(k2a, (1, 8, 40, 36), dtype=jnp.float32)
    t2 = jax.random.normal(k2b, (1, 8, 40, 36), dtype=jnp.float32)
    out2, loss2 = content_loss_forward(x2, t2, block_rows=8)
    out2, loss2 = jax.block_until_ready((out2, loss2))
    ref_loss2 = jnp.mean((x2 - t2) ** 2)
    assert jnp.allclose(out2, x2), "passthrough mismatch (case 2)"
    assert jnp.allclose(loss2, ref_loss2, rtol=1e-5, atol=1e-6), (loss2, ref_loss2)

    # Case 3: even block count -> two parallel slices, ragged boundary block
    # in the last slice, plus the wrapper tail.
    out3, loss3 = content_loss_forward(x2, t2, block_rows=16, num_slices=2)
    out3, loss3 = jax.block_until_ready((out3, loss3))
    assert jnp.allclose(out3, x2), "passthrough mismatch (case 3)"
    assert jnp.allclose(loss3, ref_loss2, rtol=1e-5, atol=1e-6), (loss3, ref_loss2)

    print("KERNEL_OK")
</pallas_src>

<mosaic_0001>
module attributes {stable_mosaic.version = 11 : i64} {
  func.func @_content_loss_kernel(%arg0: i32, %arg1: i32, %arg2: memref<4x512xf32, #tpu.memory_space<vmem>>, %arg3: memref<4x512xf32, #tpu.memory_space<vmem>>, %arg4: memref<1x1x512xf32, #tpu.memory_space<vmem>>, %arg5: memref<8x512xf32, #tpu.memory_space<vmem>>) attributes {dimension_semantics = [#tpu.dimension_semantics<parallel>, #tpu.dimension_semantics<arbitrary>], iteration_bounds = array<i64: 1, 1>, scalar_prefetch = 0 : i64, scratch_operands = 1 : i64, tpu.core_type = #tpu.core_type<tc>, window_params = [{transform_indices = @transform_0, window_bounds = array<i64: 4, 512>}, {transform_indices = @transform_1, window_bounds = array<i64: 4, 512>}, {transform_indices = @transform_2, window_bounds = array<i64: 1, 1, 512>}]} {
    %c0_i32 = arith.constant 0 : i32
    %0 = arith.cmpi eq, %arg1, %c0_i32 : i32
    %1 = arith.extui %0 : i1 to i32
    %c0_i32_0 = arith.constant 0 : i32
    %2 = arith.cmpi ne, %1, %c0_i32_0 : i32
    scf.if %2 {
      %cst_10 = arith.constant 0.000000e+00 : f32
      %15 = vector.broadcast %cst_10 : f32 to vector<8x512xf32>
      %c0_11 = arith.constant 0 : index
      %c0_12 = arith.constant 0 : index
      %16 = vector.load %arg5[%c0_11, %c0_12] : memref<8x512xf32, #tpu.memory_space<vmem>>, vector<8x512xf32>
      tpu.vector_store %arg5[%c0_11, %c0_12], %15 {strides = array<i32>} : memref<8x512xf32, #tpu.memory_space<vmem>>, vector<8x512xf32>,
    } else {
    }
    %c0 = arith.constant 0 : index
    %c0_1 = arith.constant 0 : index
    %3 = vector.load %arg2[%c0, %c0_1] : memref<4x512xf32, #tpu.memory_space<vmem>>, vector<4x512xf32>
    %c0_2 = arith.constant 0 : index
    %c0_3 = arith.constant 0 : index
    %4 = vector.load %arg3[%c0_2, %c0_3] : memref<4x512xf32, #tpu.memory_space<vmem>>, vector<4x512xf32>
    %5 = arith.subf %3, %4 : vector<4x512xf32>
    %6 = arith.mulf %5, %5 : vector<4x512xf32>
    %cst = arith.constant dense<0.000000e+00> : vector<512xf32>
    %7 = vector.multi_reduction <add>, %6, %cst [0] : vector<4x512xf32> to vector<512xf32>
    %8 = vector.shape_cast %7 : vector<512xf32> to vector<1x512xf32>
    %c0_4 = arith.constant 0 : index
    %c0_5 = arith.constant 0 : index
    %9 = vector.load %arg5[%c0_4, %c0_5] : memref<8x512xf32, #tpu.memory_space<vmem>>, vector<1x512xf32>
    %10 = arith.addf %9, %8 : vector<1x512xf32>
    %c0_6 = arith.constant 0 : index
    %c0_7 = arith.constant 0 : index
    %11 = vector.load %arg5[%c0_6, %c0_7] : memref<8x512xf32, #tpu.memory_space<vmem>>, vector<1x512xf32>
    tpu.vector_store %arg5[%c0_6, %c0_7], %10 {strides = array<i32>} : memref<8x512xf32, #tpu.memory_space<vmem>>, vector<1x512xf32>,
    %c0_i32_8 = arith.constant 0 : i32
    %12 = arith.cmpi eq, %arg1, %c0_i32_8 : i32
    %13 = arith.extui %12 : i1 to i32
    %c0_i32_9 = arith.constant 0 : i32
    %14 = arith.cmpi ne, %13, %c0_i32_9 : i32
    scf.if %14 {
      %c0_10 = arith.constant 0 : index
      %c0_11 = arith.constant 0 : index
      %15 = vector.load %arg5[%c0_10, %c0_11] : memref<8x512xf32, #tpu.memory_space<vmem>>, vector<8x512xf32>
      %cst_12 = arith.constant dense<0.000000e+00> : vector<512xf32>
      %16 = vector.multi_reduction <add>, %15, %cst_12 [0] : vector<8x512xf32> to vector<512xf32>
      %17 = vector.shape_cast %16 : vector<512xf32> to vector<1x512xf32>
      %18 = vector.shape_cast %17 : vector<1x512xf32> to vector<1x1x512xf32>
      %c0_13 = arith.constant 0 : index
      %c0_14 = arith.constant 0 : index
      %c0_15 = arith.constant 0 : index
      %19 = vector.load %arg4[%c0_13, %c0_14, %c0_15] : memref<1x1x512xf32, #tpu.memory_space<vmem>>, vector<1x1x512xf32>
      tpu.vector_store %arg4[%c0_13, %c0_14, %c0_15], %18 {strides = array<i32>} : memref<1x1x512xf32, #tpu.memory_space<vmem>>, vector<1x1x512xf32>,
    } else {
    }
    return
  }
  func.func @transform_0(%arg0: i32, %arg1: i32) -> (i32, i32) {
    %c1_i32 = arith.constant 1 : i32
    %0 = arith.muli %arg0, %c1_i32 : i32
    %1 = arith.addi %0, %arg1 : i32
    %c0_i32 = arith.constant 0 : i32
    %c0_i32_0 = arith.constant 0 : i32
    return %1, %c0_i32 : i32, i32
  }
  func.func @transform_1(%arg0: i32, %arg1: i32) -> (i32, i32) {
    %c1_i32 = arith.constant 1 : i32
    %0 = arith.muli %arg0, %c1_i32 : i32
    %1 = arith.addi %0, %arg1 : i32
    %c0_i32 = arith.constant 0 : i32
    %c0_i32_0 = arith.constant 0 : i32
    return %1, %c0_i32 : i32, i32
  }
  func.func @transform_2(%arg0: i32, %arg1: i32) -> (i32, i32, i32) {
    %c0_i32 = arith.constant 0 : i32
    %c0_i32_0 = arith.constant 0 : i32
    %c0_i32_1 = arith.constant 0 : i32
    return %arg0, %c0_i32, %c0_i32_0 : i32, i32, i32
  }
}

</mosaic_0001>

<llo_original>
// kernel: tpu_custom_call.1
$region0: #{tpu_custom_call.1}
  #allocation0 [shape = 'u32[]', space=smem, size = 0x4, offset = 0x4, fixed_abs, tag = 'smem constant byte address 0x4 - core index']
  #allocation1 [shape = 'u32[144,128]{1,0:T(1,128)}', space=vmem, size = 0x12000, scoped, tag = 'internal scratch']
  #allocation2 [shape = 'f32[8,512]{1,0:T(8,128)}', space=vmem, size = 0x4000, scoped, tag = 'scratch operand']
  %s0 = inlined_call_operand.hbm [shape: f32[4,512], index: 0, kind: input, shape index: {}]
  %s1 = inlined_call_operand.hbm [shape: f32[4,512], index: 1, kind: input, shape index: {}]
  %s2 = inlined_call_operand.hbm [shape: f32[1,1,512], index: 2, kind: output, shape index: {}]
  %s3 = sld [smem:[#allocation0]]
  $region34: #{tpu_custom_call.1} parent=0
    _
  %s5 = ssub.s32 1, %s3
  %s6 = scalar_select 0, %s5, %s3
  $region1: #{tpu_custom_call.1} parent=0
    #allocation3 [shape = 'u8[8192]{0}', space=vmem, size = 0x2000, scoped, tag = 'input window, operand 0, single buffered']
    #allocation4 [shape = 's32[1]{0}', space=sflag, size = 0x4, scoped, tag = 'scoped memory for tpu_custom_call.1']
    #allocation5 [shape = 's32[1]{0}', space=sflag, size = 0x4, scoped, tag = 'scoped memory for tpu_custom_call.1']
    #allocation6 [shape = 'u8[8192]{0}', space=vmem, size = 0x2000, scoped, tag = 'input window, operand 1, single buffered']
    #allocation7 [shape = 's32[1]{0}', space=sflag, size = 0x4, scoped, tag = 'scoped memory for tpu_custom_call.1']
    #allocation8 [shape = 'u8[2048]{0}', space=vmem, size = 0x800, scoped, tag = 'output window, operand 0, single buffered']
    %7 = vsyncpa [#allocation4], 0
    %8 = vsyncpa [#allocation7], 0
    %9 = vsyncpa [#allocation5], 0
    // Predicated region
    $region2: #{tpu_custom_call.1} parent=1 // pred_check
      _
    $region3: #{tpu_custom_call.1} parent=1 // pred_check_branch
      %11 = sbr.rel (0) target = $region5
    $region4: #{tpu_custom_call.1} parent=1 // pred_region
      %s12 = sadd.s32 0, 0
      %s14 = ssub.s32 256, 256
      %15 = vsyncadd [#allocation4], %s14
      %s16 = smul.addr %s12, 4
      %s17 = smul.addr %s16, 64
      %s18 = scalar_lea.hbm %s0, %s17
      %s20 = sshll.u32 [#allocation3], 4
      %s21 = int_to_ptr.vmem [resolvable:$true] %s20
      %23 = dma.hbm_to_vmem [thread:$0]  %s18, 256, %s21, [#allocation4]
    $region5: #{tpu_custom_call.1} parent=1 // pred_fallthru
      _
    // Predicated region
    $region6: #{tpu_custom_call.1} parent=1 // pred_check
      _
    $region7: #{tpu_custom_call.1} parent=1 // pred_check_branch
      %25 = sbr.rel (0) target = $region9
    $region8: #{tpu_custom_call.1} parent=1 // pred_region
      %s26 = sadd.s32 0, 0
      %s28 = ssub.s32 256, 256
      %29 = vsyncadd [#allocation7], %s28
      %s30 = smul.addr %s26, 4
      %s31 = smul.addr %s30, 64
      %s32 = scalar_lea.hbm %s1, %s31
      %s34 = sshll.u32 [#allocation6], 4
      %s35 = int_to_ptr.vmem [resolvable:$true] %s34
      %37 = dma.hbm_to_vmem [thread:$0]  %s32, 256, %s35, [#allocation7]
    $region9: #{tpu_custom_call.1} parent=1 // pred_fallthru
      _
    // Predicated region
    $region10: #{tpu_custom_call.1} parent=1 // pred_check
      _
    $region11: #{tpu_custom_call.1} parent=1 // pred_check_branch
      %39 = sbr.rel (0) target = $region13
    $region12: #{tpu_custom_call.1} parent=1 // pred_region
      %40 = dma.done [#allocation4], 256
    $region13: #{tpu_custom_call.1} parent=1 // pred_fallthru
      _
    // Predicated region
    $region14: #{tpu_custom_call.1} parent=1 // pred_check
      _
    $region15: #{tpu_custom_call.1} parent=1 // pred_check_branch
      %42 = sbr.rel (0) target = $region17
    $region16: #{tpu_custom_call.1} parent=1 // pred_region
      %43 = dma.done [#allocation7], 256
    $region17: #{tpu_custom_call.1} parent=1 // pred_fallthru
      _
    %s44 = sadd.s32 0, 0
    %s45 = sadd.s32 0, 0
    %p46 = scmp.eq.s32.totalorder 0, 0
    // Predicated region
    $region18: #{tpu_custom_call.1} parent=1 // pred_check
      %p47 = pneg %p46
    $region19: #{tpu_custom_call.1} parent=1 // pred_check_branch
      %49 = sbr.rel (%p47) target = $region21
    $region20: #{tpu_custom_call.1} parent=1 // pred_region
      %50 = vst [vmem:[#allocation2] sm:$0xff] 0.0
      %51 = vst [vmem:[#allocation2 + $0x8] sm:$0xff] 0.0
      %52 = vst [vmem:[#allocation2 + $0x10] sm:$0xff] 0.0
      %53 = vst [vmem:[#allocation2 + $0x18] sm:$0xff] 0.0
    $region21: #{tpu_custom_call.1} parent=1 // pred_fallthru
      _
    %v54 = vld [vmem:[#allocation3] sm:$0xff]
    %v55 = vld [vmem:[#allocation3 + $0x8] sm:$0xff]
    %v56 = vld [vmem:[#allocation6] sm:$0xff]
    %v57 = vld [vmem:[#allocation6 + $0x8] sm:$0xff]
    %v58 = vsub.f32 %v54, %v56
    %v59 = vsub.f32 %v55, %v57
    %v60 = vmul.f32 %v58, %v58
    %v61 = vmul.f32 %v59, %v59
    %v64 = vcombine.high %v60, %v60
    %v65 = vcombine.high %v61, %v61
    %vm68 = vcmask 1043456
    %v69 = vsel %vm68, %v60, 0.0
    %v70 = vrot.slane %v69, 4
    %v71 = vadd.f32 %v69, %v70
    %v72 = vrot.slane %v71, 2
    %v73 = vadd.f32 %v71, %v72
    %v74 = vrot.slane %v73, 1
    %v75 = vadd.f32 %v73, %v74
    %v76 = vsel %vm68, %v64, 0.0
    %v77 = vrot.slane %v76, 4
    %v78 = vadd.f32 %v76, %v77
    %v79 = vrot.slane %v78, 2
    %v80 = vadd.f32 %v78, %v79
    %v81 = vrot.slane %v80, 1
    %v82 = vadd.f32 %v80, %v81
    %v83 = vsel %vm68, %v61, 0.0
    %v84 = vrot.slane %v83, 4
    %v85 = vadd.f32 %v83, %v84
    %v86 = vrot.slane %v85, 2
    %v87 = vadd.f32 %v85, %v86
    %v88 = vrot.slane %v87, 1
    %v89 = vadd.f32 %v87, %v88
    %v90 = vsel %vm68, %v65, 0.0
    %v91 = vrot.slane %v90, 4
    %v92 = vadd.f32 %v90, %v91
    %v93 = vrot.slane %v92, 2
    %v94 = vadd.f32 %v92, %v93
    %v95 = vrot.slane %v94, 1
    %v96 = vadd.f32 %v94, %v95
    %v97 = vld [vmem:[#allocation2] ss:$8 sm:$0xf]
    %v102 = vcombine.low %v75, %v82
    %v103 = vcombine.low %v89, %v96
    %v105 = vunpack.c.l.s4 1966171168
    %v106 = vunpack.c.0.s8 %v105
    %v107 = vlaneseq
    %v108 = vshrl.u32 %v107, 7
    %v109 = vsub.s32 %v106, %v108
    %v110 = vrot.slane %v102, %v109
    %v112 = vunpack.c.l.s4 1966171168
    %v113 = vunpack.c.0.s8 %v112
    %v114 = vlaneseq
    %v115 = vshrl.u32 %v114, 7
    %v116 = vsub.s32 %v113, %v115
    %v117 = vrot.slane %v103, %v116
    %v118 = vcombine.low %v110, %v117
    %v120 = vunpack.c.l.s4 1966171168
    %v121 = vunpack.c.0.s8 %v120
    %v122 = vlaneseq
    %v123 = vshrl.u32 %v122, 7
    %v124 = vsub.s32 %v121, %v123
    %v125 = vrot.slane %v118, %v124
    %v127 = vadd.f32 %v97, %v125
    %v128 = vlaneseq
    %vm129 = vcmp.ge.s32.totalorder %v128, 0
    %vm130 = vcmp.lt.s32.totalorder %v128, 512
    %vm131 = vmand %vm129, %vm130
    %132 = vst.msk [vmem:[#allocation2] ss:$8 sm:$0xf] %vm131, %v127
    %133 = vst.msk [vmem:[#allocation2] ss:$8 sm:$0x0] %vm131, %v127
    // Predicated region
    $region22: #{tpu_custom_call.1} parent=1 // pred_check
      %p134 = pneg %p46
    $region23: #{tpu_custom_call.1} parent=1 // pred_check_branch
      %136 = sbr.rel (%p134) target = $region25
    $region24: #{tpu_custom_call.1} parent=1 // pred_region
      %v137 = vld [vmem:[#allocation2] sm:$0xff]
      %v138 = vld [vmem:[#allocation2 + $0x8] sm:$0xff]
      %v139 = vld [vmem:[#allocation2 + $0x10] sm:$0xff]
      %v140 = vld [vmem:[#allocation2 + $0x18] sm:$0xff]
      %v141 = vrot.slane %v137, 4
      %v142 = vadd.f32 %v137, %v141
      %v143 = vrot.slane %v142, 2
      %v144 = vadd.f32 %v142, %v143
      %v145 = vrot.slane %v144, 1
      %v146 = vadd.f32 %v144, %v145
      %v147 = vrot.slane %v138, 4
      %v148 = vadd.f32 %v138, %v147
      %v149 = vrot.slane %v148, 2
      %v150 = vadd.f32 %v148, %v149
      %v151 = vrot.slane %v150, 1
      %v152 = vadd.f32 %v150, %v151
      %v153 = vrot.slane %v139, 4
      %v154 = vadd.f32 %v139, %v153
      %v155 = vrot.slane %v154, 2
      %v156 = vadd.f32 %v154, %v155
      %v157 = vrot.slane %v156, 1
      %v158 = vadd.f32 %v156, %v157
      %v159 = vrot.slane %v140, 4
      %v160 = vadd.f32 %v140, %v159
      %v161 = vrot.slane %v160, 2
      %v162 = vadd.f32 %v160, %v161
      %v163 = vrot.slane %v162, 1
      %v164 = vadd.f32 %v162, %v163
      %v169 = vcombine.low %v146, %v152
      %v170 = vcombine.low %v158, %v164
      %v172 = vunpack.c.l.s4 1966171168
      %v173 = vunpack.c.0.s8 %v172
      %v174 = vlaneseq
      %v175 = vshrl.u32 %v174, 7
      %v176 = vsub.s32 %v173, %v175
      %v177 = vrot.slane %v169, %v176
      %v179 = vunpack.c.l.s4 1966171168
      %v180 = vunpack.c.0.s8 %v179
      %v181 = vlaneseq
      %v182 = vshrl.u32 %v181, 7
      %v183 = vsub.s32 %v180, %v182
      %v184 = vrot.slane %v170, %v183
      %v185 = vcombine.low %v177, %v184
      %v187 = vunpack.c.l.s4 1966171168
      %v188 = vunpack.c.0.s8 %v187
      %v189 = vlaneseq
      %v190 = vshrl.u32 %v189, 7
      %v191 = vsub.s32 %v188, %v190
      %v192 = vrot.slane %v185, %v191
      %194 = vst.msk [vmem:[#allocation8] sm:$0xf] %vm131, %v192
    $region25: #{tpu_custom_call.1} parent=1 // pred_fallthru
      _
    // Predicated region
    $region26: #{tpu_custom_call.1} parent=1 // pred_check
      _
    $region27: #{tpu_custom_call.1} parent=1 // pred_check_branch
      %196 = sbr.rel (0) target = $region29
    $region28: #{tpu_custom_call.1} parent=1 // pred_region
      %s198 = ssub.s32 64, 64
      %199 = vsyncadd [#allocation5], %s198
      %s201 = sshll.u32 [#allocation8], 4
      %s202 = int_to_ptr.vmem [resolvable:$true] %s201
      %204 = dma.vmem_to_hbm [thread:$0]  %s202, 64, %s2, [#allocation5]
    $region29: #{tpu_custom_call.1} parent=1 // pred_fallthru
      _
    // Predicated region
    $region30: #{tpu_custom_call.1} parent=1 // pred_check
      _
    $region31: #{tpu_custom_call.1} parent=1 // pred_check_branch
      %206 = sbr.rel (0) target = $region33
    $region32: #{tpu_custom_call.1} parent=1 // pred_region
      %207 = dma.done [#allocation5], 64
    $region33: #{tpu_custom_call.1} parent=1 // pred_fallthru
      _
    %208 = vsyncpa [#allocation4], 1
    %209 = vsyncpa [#allocation7], 1
    %210 = vsyncpa [#allocation5], 1

</llo_original>
